<compile_context>
chip_gen: v7x
topology: tpu7x:2x2x1
jax: 0.10.0
libtpu: 0.0.40
codegen_flags: <defaults>
</compile_context>

<pallas_src>
import functools
import itertools

import numpy as np
import jax
import jax.numpy as jnp
from jax.experimental import pallas as pl
from jax.experimental.pallas import tpu as pltpu


# ---------------------------------------------------------------------------
# Pallas kernel
# ---------------------------------------------------------------------------
def _cost_kernel(rel_ref, hs_ref, he_ref, ts_ref, te_ref,
                 sel_rel_ref, sel_hs_ref, sel_he_ref, sel_ts_ref, sel_te_ref,
                 out_ref):
    """One row-tile of the matching cost matrix.

    logits refs:    (row_tile, C)     C = num relation classes or seq_len
    selection refs: (C, G_pad) f32    column g is (-weight) * one_hot(gold[g])
    out ref:        (row_tile, G_pad) cost block (lane-dense)
    """

    def softmax_f32(x):
        x = x.astype(jnp.float32)           # f32 compute path (v5e-safe)
        m = jnp.max(x, axis=-1, keepdims=True)
        e = jnp.exp(x - m)
        return e / jnp.sum(e, axis=-1, keepdims=True)

    def gather(logits_ref, sel_ref):
        # softmax + "gather the gold columns", expressed as a matmul with a
        # weight-folded one-hot selection matrix (MXU-friendly, lane-dense out).
        return jnp.dot(softmax_f32(logits_ref[...]), sel_ref[...],
                       preferred_element_type=jnp.float32)

    cost = gather(rel_ref, sel_rel_ref)
    cost += gather(hs_ref, sel_hs_ref)
    cost += gather(he_ref, sel_he_ref)
    cost += gather(ts_ref, sel_ts_ref)
    cost += gather(te_ref, sel_te_ref)
    out_ref[...] = cost


# ---------------------------------------------------------------------------
# Wrapper: builds selection matrices, sizes the row tile, calls pallas_call.
# ---------------------------------------------------------------------------
def _weighted_onehot(indices, num_classes, weight, g_pad):
    """(num_classes, g_pad) matrix with column g = -weight * one_hot(indices[g])."""
    g = indices.shape[0]
    rows = jnp.arange(num_classes, dtype=jnp.int32)[:, None]        # (C, 1)
    onehot = (rows == indices[None, :].astype(jnp.int32)).astype(jnp.float32)
    sel = (-float(weight)) * onehot                                  # (C, G)
    if g_pad > g:
        sel = jnp.pad(sel, ((0, 0), (0, g_pad - g)))
    return sel


@functools.partial(jax.jit,
                   static_argnames=("cost_relation", "cost_head", "cost_tail"))
def hungarian_cost_matrix(rel_logits, hs_logits, he_logits, ts_logits, te_logits,
                          gold_rel, gold_hs, gold_he, gold_ts, gold_te,
                          *, cost_relation, cost_head, cost_tail):
    """Matching cost matrix (matcher='avg'): shape [B*T, G] float32."""
    B, T, R = rel_logits.shape
    S = hs_logits.shape[-1]
    N = B * T
    G = gold_rel.shape[0]

    # Lane-dense output: pad the gold axis up to a multiple of 128.
    G_pad = max(128, ((G + 127) // 128) * 128)

    # Row tile: as large as fits a conservative double-buffered VMEM budget
    # (safe under the 16/32/32 MiB scoped defaults of v5e/v6e/v7x).
    vmem_budget = 20 * 1024 * 1024
    bytes_per_row = 4 * (R + 4 * S + G_pad)          # f32 inputs + output per row
    const_bytes = 2 * 4 * (R + 4 * S) * G_pad        # resident selection matrices
    cap = (vmem_budget - const_bytes) // (2 * bytes_per_row)
    cap = max(8, min(2048, (cap // 8) * 8))
    row_tile = min(cap, ((N + 7) // 8) * 8)
    n_blocks = pl.cdiv(N, row_tile)
    N_pad = n_blocks * row_tile

    def flat_pad(x):
        x = x.reshape(N, x.shape[-1])
        if N_pad > N:
            x = jnp.pad(x, ((0, N_pad - N), (0, 0)))  # padded rows sliced off below
        return x

    rel = flat_pad(rel_logits)
    hs = flat_pad(hs_logits)
    he = flat_pad(he_logits)
    ts = flat_pad(ts_logits)
    te = flat_pad(te_logits)

    sel_rel = _weighted_onehot(gold_rel, R, cost_relation, G_pad)
    sel_hs = _weighted_onehot(gold_hs, S, 0.5 * cost_head, G_pad)
    sel_he = _weighted_onehot(gold_he, S, 0.5 * cost_head, G_pad)
    sel_ts = _weighted_onehot(gold_ts, S, 0.5 * cost_tail, G_pad)
    sel_te = _weighted_onehot(gold_te, S, 0.5 * cost_tail, G_pad)

    row_spec_R = pl.BlockSpec((row_tile, R), lambda i: (i, 0))
    row_spec_S = pl.BlockSpec((row_tile, S), lambda i: (i, 0))
    sel_spec_R = pl.BlockSpec((R, G_pad), lambda i: (0, 0))
    sel_spec_S = pl.BlockSpec((S, G_pad), lambda i: (0, 0))

    cost_pad = pl.pallas_call(
        _cost_kernel,
        out_shape=jax.ShapeDtypeStruct((N_pad, G_pad), jnp.float32),
        grid_spec=pltpu.PrefetchScalarGridSpec(
            num_scalar_prefetch=0,
            grid=(n_blocks,),
            in_specs=[row_spec_R, row_spec_S, row_spec_S, row_spec_S, row_spec_S,
                      sel_spec_R, sel_spec_S, sel_spec_S, sel_spec_S, sel_spec_S],
            out_specs=pl.BlockSpec((row_tile, G_pad), lambda i: (i, 0)),
        ),
        compiler_params=pltpu.CompilerParams(
            dimension_semantics=("parallel",),      # disjoint rows -> megacore OK
            vmem_limit_bytes=32 * 1024 * 1024,
        ),
    )(rel, hs, he, ts, te, sel_rel, sel_hs, sel_he, sel_ts, sel_te)

    return cost_pad[:N, :G]


# ---------------------------------------------------------------------------
# Host-side assignment + full forward (mirrors HungarianMatcher.forward)
# ---------------------------------------------------------------------------
def _linear_sum_assignment(cost):
    """Exact minimum-cost assignment via brute force (small problems only)."""
    cost = np.asarray(cost, dtype=np.float64)
    n_rows, n_cols = cost.shape
    if n_rows >= n_cols:
        best, best_val = None, np.inf
        for rows in itertools.permutations(range(n_rows), n_cols):
            val = cost[list(rows), np.arange(n_cols)].sum()
            if val < best_val:
                best_val, best = val, rows
        row_ind = np.asarray(best, dtype=np.int64)
        col_ind = np.arange(n_cols, dtype=np.int64)
    else:
        best, best_val = None, np.inf
        for cols in itertools.permutations(range(n_cols), n_rows):
            val = cost[np.arange(n_rows), list(cols)].sum()
            if val < best_val:
                best_val, best = val, cols
        row_ind = np.arange(n_rows, dtype=np.int64)
        col_ind = np.asarray(best, dtype=np.int64)
    order = np.argsort(row_ind)
    return row_ind[order], col_ind[order]


def hungarian_matcher_forward(outputs, targets, loss_weight, matcher="avg"):
    """Returns a list of (pred_indices, gold_indices) per batch element."""
    if matcher != "avg":
        # TODO(synk): matcher='min' (elementwise min of the five gathered scores) not implemented.
        raise ValueError("only matcher='avg' is implemented")
    bsz, num_gen = outputs["pred_rel_logits"].shape[:2]
    gold_rel = jnp.concatenate([t["relation"] for t in targets])
    gold_hs = jnp.concatenate([t["head_start_index"] for t in targets])
    gold_he = jnp.concatenate([t["head_end_index"] for t in targets])
    gold_ts = jnp.concatenate([t["tail_start_index"] for t in targets])
    gold_te = jnp.concatenate([t["tail_end_index"] for t in targets])

    cost = hungarian_cost_matrix(
        outputs["pred_rel_logits"], outputs["head_start_logits"],
        outputs["head_end_logits"], outputs["tail_start_logits"],
        outputs["tail_end_logits"],
        gold_rel, gold_hs, gold_he, gold_ts, gold_te,
        cost_relation=float(loss_weight["relation"]),
        cost_head=float(loss_weight["head_entity"]),
        cost_tail=float(loss_weight["tail_entity"]))
    cost = jax.block_until_ready(cost)

    # TODO(synk): linear_sum_assignment (Hungarian algorithm) is sequential and
    # runs on the host, like the .cpu() + scipy call in the PyTorch original.
    cost_np = np.asarray(cost).reshape(bsz, num_gen, -1)
    num_gold = [int(t["relation"].shape[0]) for t in targets]
    indices, off = [], 0
    for b, ng in enumerate(num_gold):
        indices.append(_linear_sum_assignment(cost_np[b, :, off:off + ng]))
        off += ng
    return indices


# ---------------------------------------------------------------------------
# Plain-JAX reference for the cost matrix
# ---------------------------------------------------------------------------
def _hungarian_cost_ref(rel_logits, hs_logits, he_logits, ts_logits, te_logits,
                        gold_rel, gold_hs, gold_he, gold_ts, gold_te,
                        cost_relation, cost_head, cost_tail):
    R = rel_logits.shape[-1]
    S = hs_logits.shape[-1]
    pr = jax.nn.softmax(rel_logits.reshape(-1, R).astype(jnp.float32), axis=-1)
    phs = jax.nn.softmax(hs_logits.reshape(-1, S).astype(jnp.float32), axis=-1)
    phe = jax.nn.softmax(he_logits.reshape(-1, S).astype(jnp.float32), axis=-1)
    pts = jax.nn.softmax(ts_logits.reshape(-1, S).astype(jnp.float32), axis=-1)
    pte = jax.nn.softmax(te_logits.reshape(-1, S).astype(jnp.float32), axis=-1)
    cost = -cost_relation * pr[:, gold_rel]
    cost -= 0.5 * cost_head * (phs[:, gold_hs] + phe[:, gold_he])
    cost -= 0.5 * cost_tail * (pts[:, gold_ts] + pte[:, gold_te])
    return cost


if __name__ == "__main__":
    B, T = 2, 8          # batch, num_generated_triples
    R = 32               # relation classes
    S = 64               # seq_len
    num_gold = [2, 3]    # gold triples per batch element
    G = sum(num_gold)
    loss_weight = {"relation": 1.0, "head_entity": 2.0, "tail_entity": 2.0}

    key = jax.random.PRNGKey(0)
    ks = jax.random.split(key, 7)
    outputs = {
        "pred_rel_logits": jax.random.normal(ks[0], (B, T, R), jnp.float32),
        "head_start_logits": jax.random.normal(ks[1], (B, T, S), jnp.float32),
        "head_end_logits": jax.random.normal(ks[2], (B, T, S), jnp.float32),
        "tail_start_logits": jax.random.normal(ks[3], (B, T, S), jnp.float32),
        "tail_end_logits": jax.random.normal(ks[4], (B, T, S), jnp.float32),
    }
    targets = []
    for i, ng in enumerate(num_gold):
        kk = jax.random.split(ks[5 + i], 5)
        targets.append({
            "relation": jax.random.randint(kk[0], (ng,), 0, R, jnp.int32),
            "head_start_index": jax.random.randint(kk[1], (ng,), 0, S, jnp.int32),
            "head_end_index": jax.random.randint(kk[2], (ng,), 0, S, jnp.int32),
            "tail_start_index": jax.random.randint(kk[3], (ng,), 0, S, jnp.int32),
            "tail_end_index": jax.random.randint(kk[4], (ng,), 0, S, jnp.int32),
        })

    # Full forward (Pallas cost matrix + host Hungarian assignment).
    indices = hungarian_matcher_forward(outputs, targets, loss_weight, "avg")

    # --- correctness checks ------------------------------------------------
    gold_rel = jnp.concatenate([t["relation"] for t in targets])
    gold_hs = jnp.concatenate([t["head_start_index"] for t in targets])
    gold_he = jnp.concatenate([t["head_end_index"] for t in targets])
    gold_ts = jnp.concatenate([t["tail_start_index"] for t in targets])
    gold_te = jnp.concatenate([t["tail_end_index"] for t in targets])

    cost = jax.block_until_ready(hungarian_cost_matrix(
        outputs["pred_rel_logits"], outputs["head_start_logits"],
        outputs["head_end_logits"], outputs["tail_start_logits"],
        outputs["tail_end_logits"],
        gold_rel, gold_hs, gold_he, gold_ts, gold_te,
        cost_relation=1.0, cost_head=2.0, cost_tail=2.0))

    ref = _hungarian_cost_ref(
        outputs["pred_rel_logits"], outputs["head_start_logits"],
        outputs["head_end_logits"], outputs["tail_start_logits"],
        outputs["tail_end_logits"],
        gold_rel, gold_hs, gold_he, gold_ts, gold_te, 1.0, 2.0, 2.0)

    # Tolerance covers possible reduced-precision MXU passes of the one-hot
    # gather; structural errors are orders of magnitude larger.
    max_err = float(jnp.max(jnp.abs(cost - ref)))
    assert max_err < 1e-2, max_err

    # Discrete check: the matching derived from the Pallas cost is optimal
    # (within rounding) w.r.t. the plain-JAX reference cost.
    ref_np = np.asarray(ref).reshape(B, T, G)
    off = 0
    for b, ng in enumerate(num_gold):
        c_ref = ref_np[b, :, off:off + ng]
        opt_rows, opt_cols = _linear_sum_assignment(c_ref)
        opt_total = c_ref[opt_rows, opt_cols].sum()
        got_rows, got_cols = indices[b]
        assert len(got_rows) == len(got_cols) == min(T, ng)
        assert len(set(got_rows.tolist())) == len(got_rows)
        got_total = c_ref[got_rows, got_cols].sum()
        assert got_total <= opt_total + 1e-3, (b, got_total, opt_total)
        off += ng

    print("KERNEL_OK")
</pallas_src>

<mosaic_0001>
module attributes {stable_mosaic.version = 11 : i64} {
  func.func @_cost_kernel(%arg0: i32, %arg1: memref<16x32xf32, #tpu.memory_space<vmem>>, %arg2: memref<16x64xf32, #tpu.memory_space<vmem>>, %arg3: memref<16x64xf32, #tpu.memory_space<vmem>>, %arg4: memref<16x64xf32, #tpu.memory_space<vmem>>, %arg5: memref<16x64xf32, #tpu.memory_space<vmem>>, %arg6: memref<32x128xf32, #tpu.memory_space<vmem>>, %arg7: memref<64x128xf32, #tpu.memory_space<vmem>>, %arg8: memref<64x128xf32, #tpu.memory_space<vmem>>, %arg9: memref<64x128xf32, #tpu.memory_space<vmem>>, %arg10: memref<64x128xf32, #tpu.memory_space<vmem>>, %arg11: memref<16x128xf32, #tpu.memory_space<vmem>>) attributes {dimension_semantics = [#tpu.dimension_semantics<parallel>], iteration_bounds = array<i64: 1>, scalar_prefetch = 0 : i64, scratch_operands = 0 : i64, tpu.core_type = #tpu.core_type<tc>, window_params = [{transform_indices = @transform_0, window_bounds = array<i64: 16, 32>}, {transform_indices = @transform_1, window_bounds = array<i64: 16, 64>}, {transform_indices = @transform_2, window_bounds = array<i64: 16, 64>}, {transform_indices = @transform_3, window_bounds = array<i64: 16, 64>}, {transform_indices = @transform_4, window_bounds = array<i64: 16, 64>}, {pipeline_mode = #tpu.pipeline_mode<synchronous>, transform_indices = @transform_5, window_bounds = array<i64: 32, 128>}, {pipeline_mode = #tpu.pipeline_mode<synchronous>, transform_indices = @transform_6, window_bounds = array<i64: 64, 128>}, {pipeline_mode = #tpu.pipeline_mode<synchronous>, transform_indices = @transform_7, window_bounds = array<i64: 64, 128>}, {pipeline_mode = #tpu.pipeline_mode<synchronous>, transform_indices = @transform_8, window_bounds = array<i64: 64, 128>}, {pipeline_mode = #tpu.pipeline_mode<synchronous>, transform_indices = @transform_9, window_bounds = array<i64: 64, 128>}, {transform_indices = @transform_10, window_bounds = array<i64: 16, 128>}]} {
    %c0 = arith.constant 0 : index
    %c0_0 = arith.constant 0 : index
    %0 = vector.load %arg1[%c0, %c0_0] : memref<16x32xf32, #tpu.memory_space<vmem>>, vector<16x32xf32>
    %cst = arith.constant dense<0xFF800000> : vector<16xf32>
    %1 = vector.multi_reduction <maximumf>, %0, %cst [1] : vector<16x32xf32> to vector<16xf32>
    %2 = vector.shape_cast %1 : vector<16xf32> to vector<16x1xf32>
    %3 = vector.broadcast %2 : vector<16x1xf32> to vector<16x32xf32>
    %4 = arith.subf %0, %3 : vector<16x32xf32>
    %5 = math.exp %4 : vector<16x32xf32>
    %cst_1 = arith.constant dense<0.000000e+00> : vector<16xf32>
    %6 = vector.multi_reduction <add>, %5, %cst_1 [1] : vector<16x32xf32> to vector<16xf32>
    %7 = vector.shape_cast %6 : vector<16xf32> to vector<16x1xf32>
    %8 = vector.broadcast %7 : vector<16x1xf32> to vector<16x32xf32>
    %9 = arith.divf %5, %8 : vector<16x32xf32>
    %c0_2 = arith.constant 0 : index
    %c0_3 = arith.constant 0 : index
    %10 = vector.load %arg6[%c0_2, %c0_3] : memref<32x128xf32, #tpu.memory_space<vmem>>, vector<32x128xf32>
    %cst_4 = arith.constant dense<0.000000e+00> : vector<16x128xf32>
    %11 = tpu.matmul %9, %10, %cst_4 {dimension_numbers = #tpu.dot_dimension_numbers<[1], [0], [0], [1], [0, 0, 1, 1], [], []>} : vector<16x32xf32>, vector<32x128xf32>, vector<16x128xf32> -> vector<16x128xf32>
    %c0_5 = arith.constant 0 : index
    %c0_6 = arith.constant 0 : index
    %12 = vector.load %arg2[%c0_5, %c0_6] : memref<16x64xf32, #tpu.memory_space<vmem>>, vector<16x64xf32>
    %cst_7 = arith.constant dense<0xFF800000> : vector<16xf32>
    %13 = vector.multi_reduction <maximumf>, %12, %cst_7 [1] : vector<16x64xf32> to vector<16xf32>
    %14 = vector.shape_cast %13 : vector<16xf32> to vector<16x1xf32>
    %15 = vector.broadcast %14 : vector<16x1xf32> to vector<16x64xf32>
    %16 = arith.subf %12, %15 : vector<16x64xf32>
    %17 = math.exp %16 : vector<16x64xf32>
    %cst_8 = arith.constant dense<0.000000e+00> : vector<16xf32>
    %18 = vector.multi_reduction <add>, %17, %cst_8 [1] : vector<16x64xf32> to vector<16xf32>
    %19 = vector.shape_cast %18 : vector<16xf32> to vector<16x1xf32>
    %20 = vector.broadcast %19 : vector<16x1xf32> to vector<16x64xf32>
    %21 = arith.divf %17, %20 : vector<16x64xf32>
    %c0_9 = arith.constant 0 : index
    %c0_10 = arith.constant 0 : index
    %22 = vector.load %arg7[%c0_9, %c0_10] : memref<64x128xf32, #tpu.memory_space<vmem>>, vector<64x128xf32>
    %cst_11 = arith.constant dense<0.000000e+00> : vector<16x128xf32>
    %23 = tpu.matmul %21, %22, %cst_11 {dimension_numbers = #tpu.dot_dimension_numbers<[1], [0], [0], [1], [0, 0, 1, 1], [], []>} : vector<16x64xf32>, vector<64x128xf32>, vector<16x128xf32> -> vector<16x128xf32>
    %24 = arith.addf %11, %23 : vector<16x128xf32>
    %c0_12 = arith.constant 0 : index
    %c0_13 = arith.constant 0 : index
    %25 = vector.load %arg3[%c0_12, %c0_13] : memref<16x64xf32, #tpu.memory_space<vmem>>, vector<16x64xf32>
    %cst_14 = arith.constant dense<0xFF800000> : vector<16xf32>
    %26 = vector.multi_reduction <maximumf>, %25, %cst_14 [1] : vector<16x64xf32> to vector<16xf32>
    %27 = vector.shape_cast %26 : vector<16xf32> to vector<16x1xf32>
    %28 = vector.broadcast %27 : vector<16x1xf32> to vector<16x64xf32>
    %29 = arith.subf %25, %28 : vector<16x64xf32>
    %30 = math.exp %29 : vector<16x64xf32>
    %cst_15 = arith.constant dense<0.000000e+00> : vector<16xf32>
    %31 = vector.multi_reduction <add>, %30, %cst_15 [1] : vector<16x64xf32> to vector<16xf32>
    %32 = vector.shape_cast %31 : vector<16xf32> to vector<16x1xf32>
    %33 = vector.broadcast %32 : vector<16x1xf32> to vector<16x64xf32>
    %34 = arith.divf %30, %33 : vector<16x64xf32>
    %c0_16 = arith.constant 0 : index
    %c0_17 = arith.constant 0 : index
    %35 = vector.load %arg8[%c0_16, %c0_17] : memref<64x128xf32, #tpu.memory_space<vmem>>, vector<64x128xf32>
    %cst_18 = arith.constant dense<0.000000e+00> : vector<16x128xf32>
    %36 = tpu.matmul %34, %35, %cst_18 {dimension_numbers = #tpu.dot_dimension_numbers<[1], [0], [0], [1], [0, 0, 1, 1], [], []>} : vector<16x64xf32>, vector<64x128xf32>, vector<16x128xf32> -> vector<16x128xf32>
    %37 = arith.addf %24, %36 : vector<16x128xf32>
    %c0_19 = arith.constant 0 : index
    %c0_20 = arith.constant 0 : index
    %38 = vector.load %arg4[%c0_19, %c0_20] : memref<16x64xf32, #tpu.memory_space<vmem>>, vector<16x64xf32>
    %cst_21 = arith.constant dense<0xFF800000> : vector<16xf32>
    %39 = vector.multi_reduction <maximumf>, %38, %cst_21 [1] : vector<16x64xf32> to vector<16xf32>
    %40 = vector.shape_cast %39 : vector<16xf32> to vector<16x1xf32>
    %41 = vector.broadcast %40 : vector<16x1xf32> to vector<16x64xf32>
    %42 = arith.subf %38, %41 : vector<16x64xf32>
    %43 = math.exp %42 : vector<16x64xf32>
    %cst_22 = arith.constant dense<0.000000e+00> : vector<16xf32>
    %44 = vector.multi_reduction <add>, %43, %cst_22 [1] : vector<16x64xf32> to vector<16xf32>
    %45 = vector.shape_cast %44 : vector<16xf32> to vector<16x1xf32>
    %46 = vector.broadcast %45 : vector<16x1xf32> to vector<16x64xf32>
    %47 = arith.divf %43, %46 : vector<16x64xf32>
    %c0_23 = arith.constant 0 : index
    %c0_24 = arith.constant 0 : index
    %48 = vector.load %arg9[%c0_23, %c0_24] : memref<64x128xf32, #tpu.memory_space<vmem>>, vector<64x128xf32>
    %cst_25 = arith.constant dense<0.000000e+00> : vector<16x128xf32>
    %49 = tpu.matmul %47, %48, %cst_25 {dimension_numbers = #tpu.dot_dimension_numbers<[1], [0], [0], [1], [0, 0, 1, 1], [], []>} : vector<16x64xf32>, vector<64x128xf32>, vector<16x128xf32> -> vector<16x128xf32>
    %50 = arith.addf %37, %49 : vector<16x128xf32>
    %c0_26 = arith.constant 0 : index
    %c0_27 = arith.constant 0 : index
    %51 = vector.load %arg5[%c0_26, %c0_27] : memref<16x64xf32, #tpu.memory_space<vmem>>, vector<16x64xf32>
    %cst_28 = arith.constant dense<0xFF800000> : vector<16xf32>
    %52 = vector.multi_reduction <maximumf>, %51, %cst_28 [1] : vector<16x64xf32> to vector<16xf32>
    %53 = vector.shape_cast %52 : vector<16xf32> to vector<16x1xf32>
    %54 = vector.broadcast %53 : vector<16x1xf32> to vector<16x64xf32>
    %55 = arith.subf %51, %54 : vector<16x64xf32>
    %56 = math.exp %55 : vector<16x64xf32>
    %cst_29 = arith.constant dense<0.000000e+00> : vector<16xf32>
    %57 = vector.multi_reduction <add>, %56, %cst_29 [1] : vector<16x64xf32> to vector<16xf32>
    %58 = vector.shape_cast %57 : vector<16xf32> to vector<16x1xf32>
    %59 = vector.broadcast %58 : vector<16x1xf32> to vector<16x64xf32>
    %60 = arith.divf %56, %59 : vector<16x64xf32>
    %c0_30 = arith.constant 0 : index
    %c0_31 = arith.constant 0 : index
    %61 = vector.load %arg10[%c0_30, %c0_31] : memref<64x128xf32, #tpu.memory_space<vmem>>, vector<64x128xf32>
    %cst_32 = arith.constant dense<0.000000e+00> : vector<16x128xf32>
    %62 = tpu.matmul %60, %61, %cst_32 {dimension_numbers = #tpu.dot_dimension_numbers<[1], [0], [0], [1], [0, 0, 1, 1], [], []>} : vector<16x64xf32>, vector<64x128xf32>, vector<16x128xf32> -> vector<16x128xf32>
    %63 = arith.addf %50, %62 : vector<16x128xf32>
    %c0_33 = arith.constant 0 : index
    %c0_34 = arith.constant 0 : index
    %64 = vector.load %arg11[%c0_33, %c0_34] : memref<16x128xf32, #tpu.memory_space<vmem>>, vector<16x128xf32>
    tpu.vector_store %arg11[%c0_33, %c0_34], %63 {strides = array<i32>} : memref<16x128xf32, #tpu.memory_space<vmem>>, vector<16x128xf32>,
    return
  }
  func.func @transform_0(%arg0: i32) -> (i32, i32) {
    %c0_i32 = arith.constant 0 : i32
    %c0_i32_0 = arith.constant 0 : i32
    return %arg0, %c0_i32 : i32, i32
  }
  func.func @transform_1(%arg0: i32) -> (i32, i32) {
    %c0_i32 = arith.constant 0 : i32
    %c0_i32_0 = arith.constant 0 : i32
    return %arg0, %c0_i32 : i32, i32
  }
  func.func @transform_2(%arg0: i32) -> (i32, i32) {
    %c0_i32 = arith.constant 0 : i32
    %c0_i32_0 = arith.constant 0 : i32
    return %arg0, %c0_i32 : i32, i32
  }
  func.func @transform_3(%arg0: i32) -> (i32, i32) {
    %c0_i32 = arith.constant 0 : i32
    %c0_i32_0 = arith.constant 0 : i32
    return %arg0, %c0_i32 : i32, i32
  }
  func.func @transform_4(%arg0: i32) -> (i32, i32) {
    %c0_i32 = arith.constant 0 : i32
    %c0_i32_0 = arith.constant 0 : i32
    return %arg0, %c0_i32 : i32, i32
  }
  func.func @transform_5(%arg0: i32) -> (i32, i32) {
    %c0_i32 = arith.constant 0 : i32
    %c0_i32_0 = arith.constant 0 : i32
    %c0_i32_1 = arith.constant 0 : i32
    return %c0_i32, %c0_i32_0 : i32, i32
  }
  func.func @transform_6(%arg0: i32) -> (i32, i32) {
    %c0_i32 = arith.constant 0 : i32
    %c0_i32_0 = arith.constant 0 : i32
    %c0_i32_1 = arith.constant 0 : i32
    return %c0_i32, %c0_i32_0 : i32, i32
  }
  func.func @transform_7(%arg0: i32) -> (i32, i32) {
    %c0_i32 = arith.constant 0 : i32
    %c0_i32_0 = arith.constant 0 : i32
    %c0_i32_1 = arith.constant 0 : i32
    return %c0_i32, %c0_i32_0 : i32, i32
  }
  func.func @transform_8(%arg0: i32) -> (i32, i32) {
    %c0_i32 = arith.constant 0 : i32
    %c0_i32_0 = arith.constant 0 : i32
    %c0_i32_1 = arith.constant 0 : i32
    return %c0_i32, %c0_i32_0 : i32, i32
  }
  func.func @transform_9(%arg0: i32) -> (i32, i32) {
    %c0_i32 = arith.constant 0 : i32
    %c0_i32_0 = arith.constant 0 : i32
    %c0_i32_1 = arith.constant 0 : i32
    return %c0_i32, %c0_i32_0 : i32, i32
  }
  func.func @transform_10(%arg0: i32) -> (i32, i32) {
    %c0_i32 = arith.constant 0 : i32
    %c0_i32_0 = arith.constant 0 : i32
    return %arg0, %c0_i32 : i32, i32
  }
}

</mosaic_0001>

<llo_original>
// kernel: hungarian_cost_matrix.1
$region0: #{hungarian_cost_matrix.1}
  #allocation0 [shape = 'u32[]', space=smem, size = 0x4, offset = 0x4, fixed_abs, tag = 'smem constant byte address 0x4 - core index']
  #allocation1 [shape = 'u32[144,128]{1,0:T(1,128)}', space=vmem, size = 0x12000, scoped, tag = 'internal scratch']
  %s0 = inlined_call_operand.vmem [shape: f32[16,32], index: 0, kind: input, shape index: {}]
  %s1 = inlined_call_operand.vmem [shape: f32[16,64], index: 1, kind: input, shape index: {}]
  %s2 = inlined_call_operand.vmem [shape: f32[16,64], index: 2, kind: input, shape index: {}]
  %s3 = inlined_call_operand.vmem [shape: f32[16,64], index: 3, kind: input, shape index: {}]
  %s4 = inlined_call_operand.vmem [shape: f32[16,64], index: 4, kind: input, shape index: {}]
  %s5 = inlined_call_operand.vmem [shape: f32[32,128], index: 5, kind: input, shape index: {}]
  %s6 = inlined_call_operand.vmem [shape: f32[64,128], index: 6, kind: input, shape index: {}]
  %s7 = inlined_call_operand.vmem [shape: f32[64,128], index: 7, kind: input, shape index: {}]
  %s8 = inlined_call_operand.vmem [shape: f32[64,128], index: 8, kind: input, shape index: {}]
  %s9 = inlined_call_operand.vmem [shape: f32[64,128], index: 9, kind: input, shape index: {}]
  %s10 = inlined_call_operand.vmem [shape: f32[16,128], index: 10, kind: output, shape index: {}]
  %s11 = sld [smem:[#allocation0]]
  $region50: #{hungarian_cost_matrix.1} parent=0
    _
  %s13 = ssub.s32 1, %s11
  %s14 = scalar_select 0, %s13, %s11
  // Predicated region
  $region2: #{hungarian_cost_matrix.1} parent=0 // pred_check
    _
  $region3: #{hungarian_cost_matrix.1} parent=0 // pred_check_branch
    %16 = sbr.rel (0) target = $region5
  $region4: #{hungarian_cost_matrix.1} parent=0 // pred_region
    _
  $region5: #{hungarian_cost_matrix.1} parent=0 // pred_fallthru
    _
  // Predicated region
  $region6: #{hungarian_cost_matrix.1} parent=0 // pred_check
    _
  $region7: #{hungarian_cost_matrix.1} parent=0 // pred_check_branch
    %18 = sbr.rel (0) target = $region9
  $region8: #{hungarian_cost_matrix.1} parent=0 // pred_region
    _
  $region9: #{hungarian_cost_matrix.1} parent=0 // pred_fallthru
    _
  // Predicated region
  $region10: #{hungarian_cost_matrix.1} parent=0 // pred_check
    _
  $region11: #{hungarian_cost_matrix.1} parent=0 // pred_check_branch
    %20 = sbr.rel (0) target = $region13
  $region12: #{hungarian_cost_matrix.1} parent=0 // pred_region
    _
  $region13: #{hungarian_cost_matrix.1} parent=0 // pred_fallthru
    _
  // Predicated region
  $region14: #{hungarian_cost_matrix.1} parent=0 // pred_check
    _
  $region15: #{hungarian_cost_matrix.1} parent=0 // pred_check_branch
    %22 = sbr.rel (0) target = $region17
  $region16: #{hungarian_cost_matrix.1} parent=0 // pred_region
    _
  $region17: #{hungarian_cost_matrix.1} parent=0 // pred_fallthru
    _
  // Predicated region
  $region18: #{hungarian_cost_matrix.1} parent=0 // pred_check
    _
  $region19: #{hungarian_cost_matrix.1} parent=0 // pred_check_branch
    %24 = sbr.rel (0) target = $region21
  $region20: #{hungarian_cost_matrix.1} parent=0 // pred_region
    _
  $region21: #{hungarian_cost_matrix.1} parent=0 // pred_fallthru
    _
  // Predicated region
  $region22: #{hungarian_cost_matrix.1} parent=0 // pred_check
    _
  $region23: #{hungarian_cost_matrix.1} parent=0 // pred_check_branch
    %26 = sbr.rel (0) target = $region25
  $region24: #{hungarian_cost_matrix.1} parent=0 // pred_region
    _
  $region25: #{hungarian_cost_matrix.1} parent=0 // pred_fallthru
    _
  // Predicated region
  $region26: #{hungarian_cost_matrix.1} parent=0 // pred_check
    _
  $region27: #{hungarian_cost_matrix.1} parent=0 // pred_check_branch
    %28 = sbr.rel (0) target = $region29
  $region28: #{hungarian_cost_matrix.1} parent=0 // pred_region
    _
  $region29: #{hungarian_cost_matrix.1} parent=0 // pred_fallthru
    _
  // Predicated region
  $region30: #{hungarian_cost_matrix.1} parent=0 // pred_check
    _
  $region31: #{hungarian_cost_matrix.1} parent=0 // pred_check_branch
    %30 = sbr.rel (0) target = $region33
  $region32: #{hungarian_cost_matrix.1} parent=0 // pred_region
    _
  $region33: #{hungarian_cost_matrix.1} parent=0 // pred_fallthru
    _
  // Predicated region
  $region34: #{hungarian_cost_matrix.1} parent=0 // pred_check
    _
  $region35: #{hungarian_cost_matrix.1} parent=0 // pred_check_branch
    %32 = sbr.rel (0) target = $region37
  $region36: #{hungarian_cost_matrix.1} parent=0 // pred_region
    _
  $region37: #{hungarian_cost_matrix.1} parent=0 // pred_fallthru
    _
  // Predicated region
  $region38: #{hungarian_cost_matrix.1} parent=0 // pred_check
    _
  $region39: #{hungarian_cost_matrix.1} parent=0 // pred_check_branch
    %34 = sbr.rel (0) target = $region41
  $region40: #{hungarian_cost_matrix.1} parent=0 // pred_region
    _
  $region41: #{hungarian_cost_matrix.1} parent=0 // pred_fallthru
    _
  %v35 = vld [vmem:[%s0] sm:$0xff]
  %v36 = vld [vmem:[%s0 + $0x8] sm:$0xff]
  %vm37 = vcmask 261120
  %v38 = vsel %vm37, %v35, -inf
  %39 = vmax.xlane.f32.xlu0 %v38
  %v40 = vpop.xlane.xlu0 %39
  %v41 = vsel %vm37, %v36, -inf
  %42 = vmax.xlane.f32.xlu0 %v41
  %v43 = vpop.xlane.xlu0 %42
  %v44 = vsub.f32 %v35, %v40
  %v45 = vsub.f32 %v36, %v43
  %v46 = vmul.f32 %v44, 1.442695
  %v47 = vpow.pop %v46
  %v48 = vmul.f32 %v45, 1.442695
  %v49 = vpow.pop %v48
  %v50 = vsel %vm37, %v47, 0.0
  %51 = vadd.xlane.f32.xlu0 %v50
  %v52 = vpop.xlane.xlu0 %51
  %v53 = vsel %vm37, %v49, 0.0
  %54 = vadd.xlane.f32.xlu0 %v53
  %v55 = vpop.xlane.xlu0 %54
  %v56 = vrcp.pop %v52
  %v57 = vmul.f32 %v47, %v56
  %v58 = vrcp.pop %v55
  %v59 = vmul.f32 %v49, %v58
  %v60 = vld [vmem:[%s5] sm:$0xff]
  %v61 = vld [vmem:[%s5 + $0x8] sm:$0xff]
  %v62 = vld [vmem:[%s5 + $0x10] sm:$0xff]
  %v63 = vld [vmem:[%s5 + $0x18] sm:$0xff]
  %v64 = vld [vmem:[%s1] sm:$0xff]
  %v65 = vld [vmem:[%s1 + $0x8] sm:$0xff]
  %vm66 = vcmask 523264
  %v67 = vsel %vm66, %v64, -inf
  %68 = vmax.xlane.f32.xlu0 %v67
  %v69 = vpop.xlane.xlu0 %68
  %v70 = vsel %vm66, %v65, -inf
  %71 = vmax.xlane.f32.xlu0 %v70
  %v72 = vpop.xlane.xlu0 %71
  %v73 = vsub.f32 %v64, %v69
  %v74 = vsub.f32 %v65, %v72
  %v75 = vmul.f32 %v73, 1.442695
  %v76 = vpow.pop %v75
  %v77 = vmul.f32 %v74, 1.442695
  %v78 = vpow.pop %v77
  %v79 = vsel %vm66, %v76, 0.0
  %80 = vadd.xlane.f32.xlu0 %v79
  %v81 = vpop.xlane.xlu0 %80
  %v82 = vsel %vm66, %v78, 0.0
  %83 = vadd.xlane.f32.xlu0 %v82
  %v84 = vpop.xlane.xlu0 %83
  %v85 = vrcp.pop %v81
  %v86 = vmul.f32 %v76, %v85
  %v87 = vrcp.pop %v84
  %v88 = vmul.f32 %v78, %v87
  %v89 = vld [vmem:[%s6] sm:$0xff]
  %v90 = vld [vmem:[%s6 + $0x8] sm:$0xff]
  %v91 = vld [vmem:[%s6 + $0x10] sm:$0xff]
  %v92 = vld [vmem:[%s6 + $0x18] sm:$0xff]
  %v93 = vld [vmem:[%s6 + $0x20] sm:$0xff]
  %v94 = vld [vmem:[%s6 + $0x28] sm:$0xff]
  %v95 = vld [vmem:[%s6 + $0x30] sm:$0xff]
  %v96 = vld [vmem:[%s6 + $0x38] sm:$0xff]
  %v98 = vsel %vm66, %v86, 0
  %v101 = vsel %vm66, %v88, 0
  %103 = vmatprep.subr.mxu0 0.0
  %104 = vmatpush1.msra.mxu0 %v89
  %105 = vmatprep.subr.mxu0 0.0
  %106 = vmatpush1.msra.mxu0 %v90
  %107 = vmatprep.subr.mxu0 0.0
  %108 = vmatpush1.msra.mxu0 %v91
  %109 = vmatprep.subr.mxu0 0.0
  %110 = vmatpush1.msra.mxu0 %v92
  %111 = vmatprep.subr.mxu0 0.0
  %112 = vmatpush1.msra.mxu0 %v93
  %113 = vmatprep.subr.mxu0 0.0
  %114 = vmatpush1.msra.mxu0 %v94
  %115 = vmatprep.subr.mxu0 0.0
  %116 = vmatpush1.msra.mxu0 %v95
  %117 = vmatprep.subr.mxu0 0.0
  %118 = vmatpush1.msra.mxu0 %v96
  %119 = vmatprep.subr.mxu0 0.0
  %120 = vmatpush1.msra.mxu0 0.0
  %121 = vmatprep.subr.mxu0 0.0
  %122 = vmatpush1.msra.mxu0 0.0
  %123 = vmatprep.subr.mxu0 0.0
  %124 = vmatpush1.msra.mxu0 0.0
  %125 = vmatprep.subr.mxu0 0.0
  %126 = vmatpush1.msra.mxu0 0.0
  %127 = vmatprep.subr.mxu0 0.0
  %128 = vmatpush1.msra.mxu0 0.0
  %129 = vmatprep.subr.mxu0 0.0
  %130 = vmatpush1.msra.mxu0 0.0
  %131 = vmatprep.subr.mxu0 0.0
  %132 = vmatpush1.msra.mxu0 0.0
  %133 = vmatprep.subr.mxu0 0.0
  %134 = vmatpush1.msra.mxu0 0.0
  %135 = vmatprep.subr.mxu0 0.0
  %136 = vmatpush1.msra.mxu0 0.0
  %137 = vmatprep.subr.mxu0 0.0
  %138 = vmatpush1.msra.mxu0 0.0
  %139 = vmatprep.subr.mxu0 0.0
  %140 = vmatpush1.msra.mxu0 0.0
  %141 = vmatprep.subr.mxu0 0.0
  %142 = vmatpush1.msra.mxu0 0.0
  %143 = vmatprep.subr.mxu0 0.0
  %144 = vmatpush1.msra.mxu0 0.0
  %145 = vmatprep.subr.mxu0 0.0
  %146 = vmatpush1.msra.mxu0 0.0
  %147 = vmatprep.subr.mxu0 0.0
  %148 = vmatpush1.msra.mxu0 0.0
  %149 = vmatprep.subr.mxu0 0.0
  %150 = vmatpush1.msra.mxu0 0.0
  %151 = vmatprep.subr.mxu0 0.0
  %152 = vmatpush1.msra.mxu0 0.0
  %153 = vmatprep.subr.mxu0 0.0
  %154 = vmatpush1.msra.mxu0 0.0
  %155 = vmatprep.subr.mxu0 0.0
  %156 = vmatpush1.msra.mxu0 0.0
  %157 = vmatprep.subr.mxu0 0.0
  %158 = vmatpush1.msra.mxu0 0.0
  %159 = vmatprep.subr.mxu0 0.0
  %160 = vmatpush1.msra.mxu0 0.0
  %161 = vmatprep.subr.mxu0 0.0
  %162 = vmatpush1.msra.mxu0 0.0
  %163 = vmatprep.subr.mxu0 0.0
  %164 = vmatpush1.msra.mxu0 0.0
  %165 = vmatprep.subr.mxu0 0.0
  %166 = vmatpush1.msra.mxu0 0.0
  %167 = vmatprep.mubr.f32.mxu0 0.0
  %168 = vmatmul.mubr.f32.gmra.mrb[0].mxu0 %v98
  %v169 = vpop.f32.mrb[0].mxu0
  %v170 = vadd.f32 0.0, %v169
  %v171 = vpop.f32.mrb[0].mxu0
  %172 = vmatprep.mubr.f32.mxu0 0.0
  %173 = vmatmul.mubr.f32.gmra.mrb[0].mxu0 %v101
  %v174 = vpop.f32.mrb[0].mxu0
  %v175 = vadd.f32 0.0, %v174
  %v176 = vpop.f32.mrb[0].mxu0
  %177 = vdwg.mxu0
  %v179 = vsel %vm37, %v57, 0
  %v182 = vsel %vm37, %v59, 0
  %184 = vmatprep.subr.mxu0 0.0
  %185 = vmatpush1.msra.mxu0 %v60
  %186 = vmatprep.subr.mxu0 0.0
  %187 = vmatpush1.msra.mxu0 %v61
  %188 = vmatprep.subr.mxu0 0.0
  %189 = vmatpush1.msra.mxu0 %v62
  %190 = vmatprep.subr.mxu0 0.0
  %191 = vmatpush1.msra.mxu0 %v63
  %192 = vmatprep.subr.mxu0 0.0
  %193 = vmatpush1.msra.mxu0 0.0
  %194 = vmatprep.subr.mxu0 0.0
  %195 = vmatpush1.msra.mxu0 0.0
  %196 = vmatprep.subr.mxu0 0.0
  %197 = vmatpush1.msra.mxu0 0.0
  %198 = vmatprep.subr.mxu0 0.0
  %199 = vmatpush1.msra.mxu0 0.0
  %200 = vmatprep.subr.mxu0 0.0
  %201 = vmatpush1.msra.mxu0 0.0
  %202 = vmatprep.subr.mxu0 0.0
  %203 = vmatpush1.msra.mxu0 0.0
  %204 = vmatprep.subr.mxu0 0.0
  %205 = vmatpush1.msra.mxu0 0.0
  %206 = vmatprep.subr.mxu0 0.0
  %207 = vmatpush1.msra.mxu0 0.0
  %208 = vmatprep.subr.mxu0 0.0
  %209 = vmatpush1.msra.mxu0 0.0
  %210 = vmatprep.subr.mxu0 0.0
  %211 = vmatpush1.msra.mxu0 0.0
  %212 = vmatprep.subr.mxu0 0.0
  %213 = vmatpush1.msra.mxu0 0.0
  %214 = vmatprep.subr.mxu0 0.0
  %215 = vmatpush1.msra.mxu0 0.0
  %216 = vmatprep.subr.mxu0 0.0
  %217 = vmatpush1.msra.mxu0 0.0
  %218 = vmatprep.subr.mxu0 0.0
  %219 = vmatpush1.msra.mxu0 0.0
  %220 = vmatprep.subr.mxu0 0.0
  %221 = vmatpush1.msra.mxu0 0.0
  %222 = vmatprep.subr.mxu0 0.0
  %223 = vmatpush1.msra.mxu0 0.0
  %224 = vmatprep.subr.mxu0 0.0
  %225 = vmatpush1.msra.mxu0 0.0
  %226 = vmatprep.subr.mxu0 0.0
  %227 = vmatpush1.msra.mxu0 0.0
  %228 = vmatprep.subr.mxu0 0.0
  %229 = vmatpush1.msra.mxu0 0.0
  %230 = vmatprep.subr.mxu0 0.0
  %231 = vmatpush1.msra.mxu0 0.0
  %232 = vmatprep.subr.mxu0 0.0
  %233 = vmatpush1.msra.mxu0 0.0
  %234 = vmatprep.subr.mxu0 0.0
  %235 = vmatpush1.msra.mxu0 0.0
  %236 = vmatprep.subr.mxu0 0.0
  %237 = vmatpush1.msra.mxu0 0.0
  %238 = vmatprep.subr.mxu0 0.0
  %239 = vmatpush1.msra.mxu0 0.0
  %240 = vmatprep.subr.mxu0 0.0
  %241 = vmatpush1.msra.mxu0 0.0
  %242 = vmatprep.subr.mxu0 0.0
  %243 = vmatpush1.msra.mxu0 0.0
  %244 = vmatprep.subr.mxu0 0.0
  %245 = vmatpush1.msra.mxu0 0.0
  %246 = vmatprep.subr.mxu0 0.0
  %247 = vmatpush1.msra.mxu0 0.0
  %248 = vmatprep.mubr.f32.mxu0 0.0
  %249 = vmatmul.mubr.f32.gmra.mrb[0].mxu0 %v179
  %v250 = vpop.f32.mrb[0].mxu0
  %v251 = vadd.f32 %v170, %v250
  %v252 = vpop.f32.mrb[0].mxu0
  %253 = vmatprep.mubr.f32.mxu0 0.0
  %254 = vmatmul.mubr.f32.gmra.mrb[0].mxu0 %v182
  %v255 = vpop.f32.mrb[0].mxu0
  %v256 = vadd.f32 %v175, %v255
  %v257 = vpop.f32.mrb[0].mxu0
  %258 = vdwg.mxu0
  %v259 = vld [vmem:[%s2] sm:$0xff]
  %v260 = vld [vmem:[%s2 + $0x8] sm:$0xff]
  %v261 = vsel %vm66, %v259, -inf
  %262 = vmax.xlane.f32.xlu0 %v261
  %v263 = vpop.xlane.xlu0 %262
  %v264 = vsel %vm66, %v260, -inf
  %265 = vmax.xlane.f32.xlu0 %v264
  %v266 = vpop.xlane.xlu0 %265
  %v267 = vsub.f32 %v259, %v263
  %v268 = vsub.f32 %v260, %v266
  %v269 = vmul.f32 %v267, 1.442695
  %v270 = vpow.pop %v269
  %v271 = vmul.f32 %v268, 1.442695
  %v272 = vpow.pop %v271
  %v273 = vsel %vm66, %v270, 0.0
  %274 = vadd.xlane.f32.xlu0 %v273
  %v275 = vpop.xlane.xlu0 %274
  %v276 = vsel %vm66, %v272, 0.0
  %277 = vadd.xlane.f32.xlu0 %v276
  %v278 = vpop.xlane.xlu0 %277
  %v279 = vrcp.pop %v275
  %v280 = vmul.f32 %v270, %v279
  %v281 = vrcp.pop %v278
  %v282 = vmul.f32 %v272, %v281
  %v283 = vld [vmem:[%s7] sm:$0xff]
  %v284 = vld [vmem:[%s7 + $0x8] sm:$0xff]
  %v285 = vld [vmem:[%s7 + $0x10] sm:$0xff]
  %v286 = vld [vmem:[%s7 + $0x18] sm:$0xff]
  %v287 = vld [vmem:[%s7 + $0x20] sm:$0xff]
  %v288 = vld [vmem:[%s7 + $0x28] sm:$0xff]
  %v289 = vld [vmem:[%s7 + $0x30] sm:$0xff]
  %v290 = vld [vmem:[%s7 + $0x38] sm:$0xff]
  %v292 = vsel %vm66, %v280, 0
  %v295 = vsel %vm66, %v282, 0
  %297 = vmatprep.subr.mxu0 0.0
  %298 = vmatpush1.msra.mxu0 %v283
  %299 = vmatprep.subr.mxu0 0.0
  %300 = vmatpush1.msra.mxu0 %v284
  %301 = vmatprep.subr.mxu0 0.0
  %302 = vmatpush1.msra.mxu0 %v285
  %303 = vmatprep.subr.mxu0 0.0
  %304 = vmatpush1.msra.mxu0 %v286
  %305 = vmatprep.subr.mxu0 0.0
  %306 = vmatpush1.msra.mxu0 %v287
  %307 = vmatprep.subr.mxu0 0.0
  %308 = vmatpush1.msra.mxu0 %v288
  %309 = vmatprep.subr.mxu0 0.0
  %310 = vmatpush1.msra.mxu0 %v289
  %311 = vmatprep.subr.mxu0 0.0
  %312 = vmatpush1.msra.mxu0 %v290
  %313 = vmatprep.subr.mxu0 0.0
  %314 = vmatpush1.msra.mxu0 0.0
  %315 = vmatprep.subr.mxu0 0.0
  %316 = vmatpush1.msra.mxu0 0.0
  %317 = vmatprep.subr.mxu0 0.0
  %318 = vmatpush1.msra.mxu0 0.0
  %319 = vmatprep.subr.mxu0 0.0
  %320 = vmatpush1.msra.mxu0 0.0
  %321 = vmatprep.subr.mxu0 0.0
  %322 = vmatpush1.msra.mxu0 0.0
  %323 = vmatprep.subr.mxu0 0.0
  %324 = vmatpush1.msra.mxu0 0.0
  %325 = vmatprep.subr.mxu0 0.0
  %326 = vmatpush1.msra.mxu0 0.0
  %327 = vmatprep.subr.mxu0 0.0
  %328 = vmatpush1.msra.mxu0 0.0
  %329 = vmatprep.subr.mxu0 0.0
  %330 = vmatpush1.msra.mxu0 0.0
  %331 = vmatprep.subr.mxu0 0.0
  %332 = vmatpush1.msra.mxu0 0.0
  %333 = vmatprep.subr.mxu0 0.0
  %334 = vmatpush1.msra.mxu0 0.0
  %335 = vmatprep.subr.mxu0 0.0
  %336 = vmatpush1.msra.mxu0 0.0
  %337 = vmatprep.subr.mxu0 0.0
  %338 = vmatpush1.msra.mxu0 0.0
  %339 = vmatprep.subr.mxu0 0.0
  %340 = vmatpush1.msra.mxu0 0.0
  %341 = vmatprep.subr.mxu0 0.0
  %342 = vmatpush1.msra.mxu0 0.0
  %343 = vmatprep.subr.mxu0 0.0
  %344 = vmatpush1.msra.mxu0 0.0
  %345 = vmatprep.subr.mxu0 0.0
  %346 = vmatpush1.msra.mxu0 0.0
  %347 = vmatprep.subr.mxu0 0.0
  %348 = vmatpush1.msra.mxu0 0.0
  %349 = vmatprep.subr.mxu0 0.0
  %350 = vmatpush1.msra.mxu0 0.0
  %351 = vmatprep.subr.mxu0 0.0
  %352 = vmatpush1.msra.mxu0 0.0
  %353 = vmatprep.subr.mxu0 0.0
  %354 = vmatpush1.msra.mxu0 0.0
  %355 = vmatprep.subr.mxu0 0.0
  %356 = vmatpush1.msra.mxu0 0.0
  %357 = vmatprep.subr.mxu0 0.0
  %358 = vmatpush1.msra.mxu0 0.0
  %359 = vmatprep.subr.mxu0 0.0
  %360 = vmatpush1.msra.mxu0 0.0
  %361 = vmatprep.mubr.f32.mxu0 0.0
  %362 = vmatmul.mubr.f32.gmra.mrb[0].mxu0 %v292
  %v363 = vpop.f32.mrb[0].mxu0
  %v364 = vadd.f32 0.0, %v363
  %v365 = vpop.f32.mrb[0].mxu0
  %366 = vmatprep.mubr.f32.mxu0 0.0
  %367 = vmatmul.mubr.f32.gmra.mrb[0].mxu0 %v295
  %v368 = vpop.f32.mrb[0].mxu0
  %v369 = vadd.f32 0.0, %v368
  %v370 = vpop.f32.mrb[0].mxu0
  %371 = vdwg.mxu0
  %v372 = vadd.f32 %v251, %v364
  %v373 = vadd.f32 %v256, %v369
  %v374 = vld [vmem:[%s3] sm:$0xff]
  %v375 = vld [vmem:[%s3 + $0x8] sm:$0xff]
  %v376 = vsel %vm66, %v374, -inf
  %377 = vmax.xlane.f32.xlu0 %v376
  %v378 = vpop.xlane.xlu0 %377
  %v379 = vsel %vm66, %v375, -inf
  %380 = vmax.xlane.f32.xlu0 %v379
  %v381 = vpop.xlane.xlu0 %380
  %v382 = vsub.f32 %v374, %v378
  %v383 = vsub.f32 %v375, %v381
  %v384 = vmul.f32 %v382, 1.442695
  %v385 = vpow.pop %v384
  %v386 = vmul.f32 %v383, 1.442695
  %v387 = vpow.pop %v386
  %v388 = vsel %vm66, %v385, 0.0
  %389 = vadd.xlane.f32.xlu0 %v388
  %v390 = vpop.xlane.xlu0 %389
  %v391 = vsel %vm66, %v387, 0.0
  %392 = vadd.xlane.f32.xlu0 %v391
  %v393 = vpop.xlane.xlu0 %392
  %v394 = vrcp.pop %v390
  %v395 = vmul.f32 %v385, %v394
  %v396 = vrcp.pop %v393
  %v397 = vmul.f32 %v387, %v396
  %v398 = vld [vmem:[%s8] sm:$0xff]
  %v399 = vld [vmem:[%s8 + $0x8] sm:$0xff]
  %v400 = vld [vmem:[%s8 + $0x10] sm:$0xff]
  %v401 = vld [vmem:[%s8 + $0x18] sm:$0xff]
  %v402 = vld [vmem:[%s8 + $0x20] sm:$0xff]
  %v403 = vld [vmem:[%s8 + $0x28] sm:$0xff]
  %v404 = vld [vmem:[%s8 + $0x30] sm:$0xff]
  %v405 = vld [vmem:[%s8 + $0x38] sm:$0xff]
  %v407 = vsel %vm66, %v395, 0
  %v410 = vsel %vm66, %v397, 0
  %412 = vmatprep.subr.mxu0 0.0
  %413 = vmatpush1.msra.mxu0 %v398
  %414 = vmatprep.subr.mxu0 0.0
  %415 = vmatpush1.msra.mxu0 %v399
  %416 = vmatprep.subr.mxu0 0.0
  %417 = vmatpush1.msra.mxu0 %v400
  %418 = vmatprep.subr.mxu0 0.0
  %419 = vmatpush1.msra.mxu0 %v401
  %420 = vmatprep.subr.mxu0 0.0
  %421 = vmatpush1.msra.mxu0 %v402
  %422 = vmatprep.subr.mxu0 0.0
  %423 = vmatpush1.msra.mxu0 %v403
  %424 = vmatprep.subr.mxu0 0.0
  %425 = vmatpush1.msra.mxu0 %v404
  %426 = vmatprep.subr.mxu0 0.0
  %427 = vmatpush1.msra.mxu0 %v405
  %428 = vmatprep.subr.mxu0 0.0
  %429 = vmatpush1.msra.mxu0 0.0
  %430 = vmatprep.subr.mxu0 0.0
  %431 = vmatpush1.msra.mxu0 0.0
  %432 = vmatprep.subr.mxu0 0.0
  %433 = vmatpush1.msra.mxu0 0.0
  %434 = vmatprep.subr.mxu0 0.0
  %435 = vmatpush1.msra.mxu0 0.0
  %436 = vmatprep.subr.mxu0 0.0
  %437 = vmatpush1.msra.mxu0 0.0
  %438 = vmatprep.subr.mxu0 0.0
  %439 = vmatpush1.msra.mxu0 0.0
  %440 = vmatprep.subr.mxu0 0.0
  %441 = vmatpush1.msra.mxu0 0.0
  %442 = vmatprep.subr.mxu0 0.0
  %443 = vmatpush1.msra.mxu0 0.0
  %444 = vmatprep.subr.mxu0 0.0
  %445 = vmatpush1.msra.mxu0 0.0
  %446 = vmatprep.subr.mxu0 0.0
  %447 = vmatpush1.msra.mxu0 0.0
  %448 = vmatprep.subr.mxu0 0.0
  %449 = vmatpush1.msra.mxu0 0.0
  %450 = vmatprep.subr.mxu0 0.0
  %451 = vmatpush1.msra.mxu0 0.0
  %452 = vmatprep.subr.mxu0 0.0
  %453 = vmatpush1.msra.mxu0 0.0
  %454 = vmatprep.subr.mxu0 0.0
  %455 = vmatpush1.msra.mxu0 0.0
  %456 = vmatprep.subr.mxu0 0.0
  %457 = vmatpush1.msra.mxu0 0.0
  %458 = vmatprep.subr.mxu0 0.0
  %459 = vmatpush1.msra.mxu0 0.0
  %460 = vmatprep.subr.mxu0 0.0
  %461 = vmatpush1.msra.mxu0 0.0
  %462 = vmatprep.subr.mxu0 0.0
  %463 = vmatpush1.msra.mxu0 0.0
  %464 = vmatprep.subr.mxu0 0.0
  %465 = vmatpush1.msra.mxu0 0.0
  %466 = vmatprep.subr.mxu0 0.0
  %467 = vmatpush1.msra.mxu0 0.0
  %468 = vmatprep.subr.mxu0 0.0
  %469 = vmatpush1.msra.mxu0 0.0
  %470 = vmatprep.subr.mxu0 0.0
  %471 = vmatpush1.msra.mxu0 0.0
  %472 = vmatprep.subr.mxu0 0.0
  %473 = vmatpush1.msra.mxu0 0.0
  %474 = vmatprep.subr.mxu0 0.0
  %475 = vmatpush1.msra.mxu0 0.0
  %476 = vmatprep.mubr.f32.mxu0 0.0
  %477 = vmatmul.mubr.f32.gmra.mrb[0].mxu0 %v407
  %v478 = vpop.f32.mrb[0].mxu0
  %v479 = vadd.f32 0.0, %v478
  %v480 = vpop.f32.mrb[0].mxu0
  %481 = vmatprep.mubr.f32.mxu0 0.0
  %482 = vmatmul.mubr.f32.gmra.mrb[0].mxu0 %v410
  %v483 = vpop.f32.mrb[0].mxu0
  %v484 = vadd.f32 0.0, %v483
  %v485 = vpop.f32.mrb[0].mxu0
  %486 = vdwg.mxu0
  %v487 = vadd.f32 %v372, %v479
  %v488 = vadd.f32 %v373, %v484
  %v489 = vld [vmem:[%s4] sm:$0xff]
  %v490 = vld [vmem:[%s4 + $0x8] sm:$0xff]
  %v491 = vsel %vm66, %v489, -inf
  %492 = vmax.xlane.f32.xlu0 %v491
  %v493 = vpop.xlane.xlu0 %492
  %v494 = vsel %vm66, %v490, -inf
  %495 = vmax.xlane.f32.xlu0 %v494
  %v496 = vpop.xlane.xlu0 %495
  %v497 = vsub.f32 %v489, %v493
  %v498 = vsub.f32 %v490, %v496
  %v499 = vmul.f32 %v497, 1.442695
  %v500 = vpow.pop %v499
  %v501 = vmul.f32 %v498, 1.442695
  %v502 = vpow.pop %v501
  %v503 = vsel %vm66, %v500, 0.0
  %504 = vadd.xlane.f32.xlu0 %v503
  %v505 = vpop.xlane.xlu0 %504
  %v506 = vsel %vm66, %v502, 0.0
  %507 = vadd.xlane.f32.xlu0 %v506
  %v508 = vpop.xlane.xlu0 %507
  %v509 = vrcp.pop %v505
  %v510 = vmul.f32 %v500, %v509
  %v511 = vrcp.pop %v508
  %v512 = vmul.f32 %v502, %v511
  %v513 = vld [vmem:[%s9] sm:$0xff]
  %v514 = vld [vmem:[%s9 + $0x8] sm:$0xff]
  %v515 = vld [vmem:[%s9 + $0x10] sm:$0xff]
  %v516 = vld [vmem:[%s9 + $0x18] sm:$0xff]
  %v517 = vld [vmem:[%s9 + $0x20] sm:$0xff]
  %v518 = vld [vmem:[%s9 + $0x28] sm:$0xff]
  %v519 = vld [vmem:[%s9 + $0x30] sm:$0xff]
  %v520 = vld [vmem:[%s9 + $0x38] sm:$0xff]
  %v522 = vsel %vm66, %v510, 0
  %v525 = vsel %vm66, %v512, 0
  %527 = vmatprep.subr.mxu0 0.0
  %528 = vmatpush1.msra.mxu0 %v513
  %529 = vmatprep.subr.mxu0 0.0
  %530 = vmatpush1.msra.mxu0 %v514
  %531 = vmatprep.subr.mxu0 0.0
  %532 = vmatpush1.msra.mxu0 %v515
  %533 = vmatprep.subr.mxu0 0.0
  %534 = vmatpush1.msra.mxu0 %v516
  %535 = vmatprep.subr.mxu0 0.0
  %536 = vmatpush1.msra.mxu0 %v517
  %537 = vmatprep.subr.mxu0 0.0
  %538 = vmatpush1.msra.mxu0 %v518
  %539 = vmatprep.subr.mxu0 0.0
  %540 = vmatpush1.msra.mxu0 %v519
  %541 = vmatprep.subr.mxu0 0.0
  %542 = vmatpush1.msra.mxu0 %v520
  %543 = vmatprep.subr.mxu0 0.0
  %544 = vmatpush1.msra.mxu0 0.0
  %545 = vmatprep.subr.mxu0 0.0
  %546 = vmatpush1.msra.mxu0 0.0
  %547 = vmatprep.subr.mxu0 0.0
  %548 = vmatpush1.msra.mxu0 0.0
  %549 = vmatprep.subr.mxu0 0.0
  %550 = vmatpush1.msra.mxu0 0.0
  %551 = vmatprep.subr.mxu0 0.0
  %552 = vmatpush1.msra.mxu0 0.0
  %553 = vmatprep.subr.mxu0 0.0
  %554 = vmatpush1.msra.mxu0 0.0
  %555 = vmatprep.subr.mxu0 0.0
  %556 = vmatpush1.msra.mxu0 0.0
  %557 = vmatprep.subr.mxu0 0.0
  %558 = vmatpush1.msra.mxu0 0.0
  %559 = vmatprep.subr.mxu0 0.0
  %560 = vmatpush1.msra.mxu0 0.0
  %561 = vmatprep.subr.mxu0 0.0
  %562 = vmatpush1.msra.mxu0 0.0
  %563 = vmatprep.subr.mxu0 0.0
  %564 = vmatpush1.msra.mxu0 0.0
  %565 = vmatprep.subr.mxu0 0.0
  %566 = vmatpush1.msra.mxu0 0.0
  %567 = vmatprep.subr.mxu0 0.0
  %568 = vmatpush1.msra.mxu0 0.0
  %569 = vmatprep.subr.mxu0 0.0
  %570 = vmatpush1.msra.mxu0 0.0
  %571 = vmatprep.subr.mxu0 0.0
  %572 = vmatpush1.msra.mxu0 0.0
  %573 = vmatprep.subr.mxu0 0.0
  %574 = vmatpush1.msra.mxu0 0.0
  %575 = vmatprep.subr.mxu0 0.0
  %576 = vmatpush1.msra.mxu0 0.0
  %577 = vmatprep.subr.mxu0 0.0
  %578 = vmatpush1.msra.mxu0 0.0
  %579 = vmatprep.subr.mxu0 0.0
  %580 = vmatpush1.msra.mxu0 0.0
  %581 = vmatprep.subr.mxu0 0.0
  %582 = vmatpush1.msra.mxu0 0.0
  %583 = vmatprep.subr.mxu0 0.0
  %584 = vmatpush1.msra.mxu0 0.0
  %585 = vmatprep.subr.mxu0 0.0
  %586 = vmatpush1.msra.mxu0 0.0
  %587 = vmatprep.subr.mxu0 0.0
  %588 = vmatpush1.msra.mxu0 0.0
  %589 = vmatprep.subr.mxu0 0.0
  %590 = vmatpush1.msra.mxu0 0.0
  %591 = vmatprep.mubr.f32.mxu0 0.0
  %592 = vmatmul.mubr.f32.gmra.mrb[0].mxu0 %v522
  %v593 = vpop.f32.mrb[0].mxu0
  %v594 = vadd.f32 0.0, %v593
  %v595 = vpop.f32.mrb[0].mxu0
  %596 = vmatprep.mubr.f32.mxu0 0.0
  %597 = vmatmul.mubr.f32.gmra.mrb[0].mxu0 %v525
  %v598 = vpop.f32.mrb[0].mxu0
  %v599 = vadd.f32 0.0, %v598
  %v600 = vpop.f32.mrb[0].mxu0
  %601 = vdwg.mxu0
  %v602 = vadd.f32 %v487, %v594
  %v603 = vadd.f32 %v488, %v599
  %604 = vst [vmem:[%s10] sm:$0xff] %v602
  %605 = vst [vmem:[%s10 + $0x8] sm:$0xff] %v603
  // Predicated region
  $region42: #{hungarian_cost_matrix.1} parent=0 // pred_check
    _
  $region43: #{hungarian_cost_matrix.1} parent=0 // pred_check_branch
    %607 = sbr.rel (0) target = $region45
  $region44: #{hungarian_cost_matrix.1} parent=0 // pred_region
    _
  $region45: #{hungarian_cost_matrix.1} parent=0 // pred_fallthru
    _
  // Predicated region
  $region46: #{hungarian_cost_matrix.1} parent=0 // pred_check
    _
  $region47: #{hungarian_cost_matrix.1} parent=0 // pred_check_branch
    %609 = sbr.rel (0) target = $region49
  $region48: #{hungarian_cost_matrix.1} parent=0 // pred_region
    _
  $region49: #{hungarian_cost_matrix.1} parent=0 // pred_fallthru
    _

</llo_original>
